<compile_context>
chip_gen: v7x
topology: tpu7x:2x2x1
jax: 0.10.0
libtpu: 0.0.40
codegen_flags: <defaults>
</compile_context>

<pallas_src>
import jax
import jax.numpy as jnp
from jax.experimental import pallas as pl
from jax.experimental.pallas import tpu as pltpu

_EPS = 1e-5  # matches the PyTorch module's hard-coded eps


def _cond_var_norm_kernel(x_ref, g_ref, o_ref):
    # x_ref: (tile_rows, HW) block, g_ref: (tile_rows, 1) per-row gamma.
    x = x_ref[...].astype(jnp.float32)
    hw = x.shape[-1]
    mean = jnp.mean(x, axis=-1, keepdims=True)
    d = x - mean
    # torch.var default is unbiased (correction = 1) -> divide by HW - 1.
    var = jnp.sum(d * d, axis=-1, keepdims=True) * (1.0 / (hw - 1))
    scale = g_ref[...].astype(jnp.float32) * jax.lax.rsqrt(var + _EPS)
    o_ref[...] = (x * scale).astype(o_ref.dtype)


def _pick_tile_rows(rows, hw, itemsize, target_bytes=2 * 1024 * 1024):
    """Largest convenient row tile: multiple of 8, divides rows, ~<=2 MiB block."""
    if rows % 8 != 0:
        # Full extent is always a legal block shape for the second-to-last dim.
        return rows
    for cand in (2048, 1024, 512, 256, 128, 64, 32, 16, 8):
        if cand <= rows and rows % cand == 0 and cand * hw * itemsize <= target_bytes:
            return cand
    return rows if rows < 8 else 8


def conditional_variance_norm(x, y, embed_weight):
    """Pallas implementation of ConditionalVarianceNorm1d.forward(x, y).

    x: (N, C, H, W) float array.
    y: (N,) int class labels.
    embed_weight: (num_classes, C) embedding table (gamma).
    """
    n, c, h, w = x.shape
    hw = h * w
    rows = n * c

    # Embedding lookup (gather) done in the wrapper; kernel gets per-row gamma.
    gamma = jnp.take(embed_weight, y, axis=0)            # (N, C)
    g2d = gamma.reshape(rows, 1).astype(jnp.float32)

    x2d = x.reshape(rows, hw)                            # lane-dense last axis

    tile_rows = _pick_tile_rows(rows, hw, x.dtype.itemsize)
    grid = (rows // tile_rows,)

    out2d = pl.pallas_call(
        _cond_var_norm_kernel,
        out_shape=jax.ShapeDtypeStruct((rows, hw), x.dtype),
        grid=grid,
        in_specs=[
            pl.BlockSpec((tile_rows, hw), lambda i: (i, 0)),
            pl.BlockSpec((tile_rows, 1), lambda i: (i, 0)),
        ],
        out_specs=pl.BlockSpec((tile_rows, hw), lambda i: (i, 0)),
        compiler_params=pltpu.CompilerParams(
            dimension_semantics=("parallel",),
        ),
    )(x2d, g2d)

    return out2d.reshape(n, c, h, w)


def _reference(x, y, embed_weight):
    # Pure-JAX reference mirroring the PyTorch forward exactly.
    hw = x.shape[2] * x.shape[3]
    mean = jnp.mean(x, axis=(2, 3), keepdims=True)
    var = jnp.sum((x - mean) ** 2, axis=(2, 3), keepdims=True) / (hw - 1)
    h = x / jnp.sqrt(var + _EPS)
    gamma = jnp.take(embed_weight, y, axis=0)            # (N, C)
    return gamma[:, :, None, None] * h


if __name__ == "__main__":
    key = jax.random.PRNGKey(0)
    k_x, k_w = jax.random.split(key)

    num_features = 4
    num_classes = 10
    n, c, h, w = 2, num_features, 16, 16

    x = jax.random.normal(k_x, (n, c, h, w), dtype=jnp.float32)
    y = jnp.array([0, 1], dtype=jnp.int32)
    # embed.weight.data.normal_(1, 0.02)
    embed_weight = 1.0 + 0.02 * jax.random.normal(
        k_w, (num_classes, num_features), dtype=jnp.float32
    )

    out = conditional_variance_norm(x, y, embed_weight)
    out = jax.block_until_ready(out)

    ref = _reference(x, y, embed_weight)

    assert out.shape == x.shape and out.dtype == x.dtype
    assert jnp.allclose(out, ref, rtol=1e-5, atol=1e-5), float(
        jnp.max(jnp.abs(out - ref))
    )
    print("KERNEL_OK")
</pallas_src>

<mosaic_0001>
module attributes {stable_mosaic.version = 11 : i64} {
  func.func @_cond_var_norm_kernel(%arg0: i32, %arg1: memref<8x256xf32, #tpu.memory_space<vmem>>, %arg2: memref<8x1xf32, #tpu.memory_space<vmem>>, %arg3: memref<8x256xf32, #tpu.memory_space<vmem>>) attributes {dimension_semantics = [#tpu.dimension_semantics<parallel>], iteration_bounds = array<i64: 1>, scalar_prefetch = 0 : i64, scratch_operands = 0 : i64, tpu.core_type = #tpu.core_type<tc>, window_params = [{transform_indices = @transform_0, window_bounds = array<i64: 8, 256>}, {transform_indices = @transform_1, window_bounds = array<i64: 8, 1>}, {transform_indices = @transform_2, window_bounds = array<i64: 8, 256>}]} {
    %c0 = arith.constant 0 : index
    %c0_0 = arith.constant 0 : index
    %0 = vector.load %arg1[%c0, %c0_0] : memref<8x256xf32, #tpu.memory_space<vmem>>, vector<8x256xf32>
    %cst = arith.constant dense<0.000000e+00> : vector<8xf32>
    %1 = vector.multi_reduction <add>, %0, %cst [1] : vector<8x256xf32> to vector<8xf32>
    %2 = vector.shape_cast %1 : vector<8xf32> to vector<8x1xf32>
    %cst_1 = arith.constant 2.560000e+02 : f32
    %3 = vector.broadcast %cst_1 : f32 to vector<8x1xf32>
    %4 = arith.divf %2, %3 : vector<8x1xf32>
    %5 = vector.broadcast %4 : vector<8x1xf32> to vector<8x256xf32>
    %6 = arith.subf %0, %5 : vector<8x256xf32>
    %7 = arith.mulf %6, %6 : vector<8x256xf32>
    %cst_2 = arith.constant dense<0.000000e+00> : vector<8xf32>
    %8 = vector.multi_reduction <add>, %7, %cst_2 [1] : vector<8x256xf32> to vector<8xf32>
    %9 = vector.shape_cast %8 : vector<8xf32> to vector<8x1xf32>
    %cst_3 = arith.constant 0.00392156886 : f32
    %10 = vector.broadcast %cst_3 : f32 to vector<8x1xf32>
    %11 = arith.mulf %9, %10 : vector<8x1xf32>
    %c0_4 = arith.constant 0 : index
    %c0_5 = arith.constant 0 : index
    %12 = vector.load %arg2[%c0_4, %c0_5] : memref<8x1xf32, #tpu.memory_space<vmem>>, vector<8x1xf32>
    %cst_6 = arith.constant 9.99999974E-6 : f32
    %13 = vector.broadcast %cst_6 : f32 to vector<8x1xf32>
    %14 = arith.addf %11, %13 : vector<8x1xf32>
    %15 = math.rsqrt %14 : vector<8x1xf32>
    %16 = arith.mulf %12, %15 : vector<8x1xf32>
    %17 = vector.broadcast %16 : vector<8x1xf32> to vector<8x256xf32>
    %18 = arith.mulf %0, %17 : vector<8x256xf32>
    %c0_7 = arith.constant 0 : index
    %c0_8 = arith.constant 0 : index
    %19 = vector.load %arg3[%c0_7, %c0_8] : memref<8x256xf32, #tpu.memory_space<vmem>>, vector<8x256xf32>
    tpu.vector_store %arg3[%c0_7, %c0_8], %18 {strides = array<i32>} : memref<8x256xf32, #tpu.memory_space<vmem>>, vector<8x256xf32>,
    return
  }
  func.func @transform_0(%arg0: i32) -> (i32, i32) {
    %c0_i32 = arith.constant 0 : i32
    %c0_i32_0 = arith.constant 0 : i32
    return %arg0, %c0_i32 : i32, i32
  }
  func.func @transform_1(%arg0: i32) -> (i32, i32) {
    %c0_i32 = arith.constant 0 : i32
    %c0_i32_0 = arith.constant 0 : i32
    return %arg0, %c0_i32 : i32, i32
  }
  func.func @transform_2(%arg0: i32) -> (i32, i32) {
    %c0_i32 = arith.constant 0 : i32
    %c0_i32_0 = arith.constant 0 : i32
    return %arg0, %c0_i32 : i32, i32
  }
}

</mosaic_0001>

<llo_original>
// kernel: tpu_custom_call.1
$region0: #{tpu_custom_call.1}
  #allocation0 [shape = 'u32[]', space=smem, size = 0x4, offset = 0x4, fixed_abs, tag = 'smem constant byte address 0x4 - core index']
  #allocation1 [shape = 'u32[144,128]{1,0:T(1,128)}', space=vmem, size = 0x12000, scoped, tag = 'internal scratch']
  %s0 = inlined_call_operand.hbm [shape: f32[8,256], index: 0, kind: input, shape index: {}]
  %s1 = inlined_call_operand.vmem [shape: f32[8,1], index: 1, kind: input, shape index: {}]
  %s2 = inlined_call_operand.hbm [shape: f32[8,256], index: 2, kind: output, shape index: {}]
  %s3 = sld [smem:[#allocation0]]
  $region22: #{tpu_custom_call.1} parent=0
    _
  %s5 = ssub.s32 1, %s3
  %s6 = scalar_select 0, %s5, %s3
  $region1: #{tpu_custom_call.1} parent=0
    #allocation2 [shape = 'u8[8192]{0}', space=vmem, size = 0x2000, scoped, tag = 'input window, operand 0, single buffered']
    #allocation3 [shape = 's32[1]{0}', space=sflag, size = 0x4, scoped, tag = 'scoped memory for tpu_custom_call.1']
    #allocation4 [shape = 's32[1]{0}', space=sflag, size = 0x4, scoped, tag = 'scoped memory for tpu_custom_call.1']
    #allocation5 [shape = 'u8[8192]{0}', space=vmem, size = 0x2000, scoped, tag = 'output window, operand 0, single buffered']
    %7 = vsyncpa [#allocation3], 0
    %8 = vsyncpa [#allocation4], 0
    // Predicated region
    $region2: #{tpu_custom_call.1} parent=1 // pred_check
      _
    $region3: #{tpu_custom_call.1} parent=1 // pred_check_branch
      %10 = sbr.rel (0) target = $region5
    $region4: #{tpu_custom_call.1} parent=1 // pred_region
      %s12 = ssub.s32 256, 256
      %13 = vsyncadd [#allocation3], %s12
      %s15 = sshll.u32 [#allocation2], 4
      %s16 = int_to_ptr.vmem [resolvable:$true] %s15
      %18 = dma.hbm_to_vmem [thread:$0]  %s0, 256, %s16, [#allocation3]
    $region5: #{tpu_custom_call.1} parent=1 // pred_fallthru
      _
    // Predicated region
    $region6: #{tpu_custom_call.1} parent=1 // pred_check
      _
    $region7: #{tpu_custom_call.1} parent=1 // pred_check_branch
      %20 = sbr.rel (0) target = $region9
    $region8: #{tpu_custom_call.1} parent=1 // pred_region
      _
    $region9: #{tpu_custom_call.1} parent=1 // pred_fallthru
      _
    // Predicated region
    $region10: #{tpu_custom_call.1} parent=1 // pred_check
      _
    $region11: #{tpu_custom_call.1} parent=1 // pred_check_branch
      %22 = sbr.rel (0) target = $region13
    $region12: #{tpu_custom_call.1} parent=1 // pred_region
      %23 = dma.done [#allocation3], 256
    $region13: #{tpu_custom_call.1} parent=1 // pred_fallthru
      _
    %v24 = vld [vmem:[#allocation2] sm:$0xff]
    %v25 = vld [vmem:[#allocation2 + $0x8] sm:$0xff]
    %v26 = vadd.f32 %v24, %v25
    %27 = vadd.xlane.f32.xlu0 %v26
    %v28 = vpop.xlane.xlu0 %27
    %v29 = vrcp.pop 256.0
    %v30 = vmul.f32 %v28, %v29
    %v31 = vsub.f32 %v24, %v30
    %v32 = vsub.f32 %v25, %v30
    %v33 = vmul.f32 %v31, %v31
    %v34 = vmul.f32 %v32, %v32
    %v35 = vadd.f32 %v33, %v34
    %36 = vadd.xlane.f32.xlu0 %v35
    %v37 = vpop.xlane.xlu0 %36
    %v38 = vmul.f32 %v37, 0.003921569
    %v39 = vld [vmem:[%s1] sm:$0xff]
    %v40 = vadd.f32 %v38, 1e-05
    %v41 = vrsqrt.pop %v40
    %v42 = vmul.f32 %v39, %v41
    %44 = vset.pattern.permute.xlu0 0
    %45 = vperm.xlu0 %44, %v42
    %v46 = vpop.permute.xlu0 %45
    %v48 = vmul.f32 %v24, %v46
    %v49 = vmul.f32 %v25, %v46
    %50 = vst [vmem:[#allocation5] sm:$0xff] %v48
    %51 = vst [vmem:[#allocation5 + $0x8] sm:$0xff] %v49
    // Predicated region
    $region14: #{tpu_custom_call.1} parent=1 // pred_check
      _
    $region15: #{tpu_custom_call.1} parent=1 // pred_check_branch
      %53 = sbr.rel (0) target = $region17
    $region16: #{tpu_custom_call.1} parent=1 // pred_region
      %s55 = ssub.s32 256, 256
      %56 = vsyncadd [#allocation4], %s55
      %s58 = sshll.u32 [#allocation5], 4
      %s59 = int_to_ptr.vmem [resolvable:$true] %s58
      %61 = dma.vmem_to_hbm [thread:$0]  %s59, 256, %s2, [#allocation4]
    $region17: #{tpu_custom_call.1} parent=1 // pred_fallthru
      _
    // Predicated region
    $region18: #{tpu_custom_call.1} parent=1 // pred_check
      _
    $region19: #{tpu_custom_call.1} parent=1 // pred_check_branch
      %63 = sbr.rel (0) target = $region21
    $region20: #{tpu_custom_call.1} parent=1 // pred_region
      %64 = dma.done [#allocation4], 256
    $region21: #{tpu_custom_call.1} parent=1 // pred_fallthru
      _
    %65 = vsyncpa [#allocation3], 1
    %66 = vsyncpa [#allocation4], 1

</llo_original>
